<compile_context>
chip_gen: v5e
topology: v5e:2x2
jax: 0.10.0
libtpu: 0.0.40
codegen_flags: <defaults>
</compile_context>

<pallas_src>
import jax
import jax.numpy as jnp
from jax.experimental import pallas as pl
from jax.experimental.pallas import tpu as pltpu

LANE = 128              # TPU lane width (last vreg dim)
SUBLANE = 8             # TPU sublane count
SMALL_DIRECT_MAX = 1024  # below this, a pack-unaligned batch just runs unpacked


def _linear_kernel(x_ref, w_ref, b_ref, o_ref):
    # o = x @ w + b: one MXU matmul with f32 accumulation, f32 bias epilogue
    # (v5e-safe), cast only on the store.
    acc = jnp.dot(x_ref[...], w_ref[...], preferred_element_type=jnp.float32)
    o_ref[...] = (acc + b_ref[...]).astype(o_ref.dtype)


def prepare_params(weight, bias):
    """One-time parameter packing (per parameter update, NOT per forward).

    weight: [out_features, in_features] (PyTorch nn.Linear layout)
    bias:   [out_features]
    """
    out_f, in_f = weight.shape
    assert bias.shape == (out_f,)
    assert in_f <= LANE and out_f <= LANE, "kernel assumes in/out features <= 128"
    pack = LANE // max(in_f, out_f)          # 16 for the 8->8 layer
    assert pack >= 1

    w_t = weight.T.astype(jnp.float32)                       # [in, out]
    b_row = bias.reshape(1, out_f).astype(jnp.float32)        # [1, out]
    # Block-diagonal packed weight: `pack` copies of W^T on the diagonal so a
    # single matmul on a packed [R, pack*in] slab yields a [R, pack*out] slab.
    w_bd = jnp.kron(jnp.eye(pack, dtype=jnp.float32), w_t)    # [pack*in, pack*out]
    b_bd = jnp.tile(b_row, (1, pack))                          # [1, pack*out]
    return dict(in_features=in_f, out_features=out_f, pack=pack,
                w_t=w_t, b_row=b_row, w_bd=w_bd, b_bd=b_bd)


def _linear_direct(x, params):
    """Tiny / pack-unaligned batches: single launch on the unpadded arrays."""
    B, _ = x.shape
    out_f = params["out_features"]
    return pl.pallas_call(
        _linear_kernel,
        out_shape=jax.ShapeDtypeStruct((B, out_f), x.dtype),
        in_specs=[
            pl.BlockSpec(memory_space=pltpu.MemorySpace.VMEM),
            pl.BlockSpec(memory_space=pltpu.MemorySpace.VMEM),
            pl.BlockSpec(memory_space=pltpu.MemorySpace.VMEM),
        ],
        out_specs=pl.BlockSpec(memory_space=pltpu.MemorySpace.VMEM),
    )(x, params["w_t"], params["b_row"])


def _linear_packed(xp, params, block_rows):
    """xp: [R, pack*in] lane-dense packed activations."""
    R, width_in = xp.shape
    w_bd, b_bd = params["w_bd"], params["b_bd"]
    width_out = w_bd.shape[1]
    itemsize = xp.dtype.itemsize

    if R <= block_rows:
        # Single block: no grid / pipeline machinery, everything VMEM-resident.
        return pl.pallas_call(
            _linear_kernel,
            out_shape=jax.ShapeDtypeStruct((R, width_out), xp.dtype),
            in_specs=[
                pl.BlockSpec(memory_space=pltpu.MemorySpace.VMEM),
                pl.BlockSpec(memory_space=pltpu.MemorySpace.VMEM),
                pl.BlockSpec(memory_space=pltpu.MemorySpace.VMEM),
            ],
            out_specs=pl.BlockSpec(memory_space=pltpu.MemorySpace.VMEM),
        )(xp, w_bd, b_bd)

    # Tiled path: caller guarantees R % block_rows == 0, so the grid has >= 2
    # full steps (both v7x TensorCores get work) and every store is a full tile.
    n_blocks = R // block_rows
    tile_in = block_rows * width_in * itemsize
    tile_out = block_rows * width_out * itemsize
    w_bytes = w_bd.size * w_bd.dtype.itemsize
    b_bytes = b_bd.size * b_bd.dtype.itemsize
    # Double-buffered in/out tiles + resident weight/bias, sized from the real
    # footprint (~8-12 MiB for the 4096-row default) -> safe on v7x's 32 MiB
    # scoped VMEM and leaves compiler headroom on v5e/v6e.
    vmem_needed = 2 * (tile_in + tile_out) + 2 * (w_bytes + b_bytes)
    vmem_limit = min(int(vmem_needed * 1.25) + (2 << 20), 32 << 20)

    return pl.pallas_call(
        _linear_kernel,
        out_shape=jax.ShapeDtypeStruct((R, width_out), xp.dtype),
        grid=(n_blocks,),
        in_specs=[
            pl.BlockSpec((block_rows, width_in), lambda i: (i, 0)),
            # Constant block index -> weight/bias DMA'd once and kept
            # VMEM-resident across grid steps.
            pl.BlockSpec((w_bd.shape[0], width_out), lambda i: (0, 0)),
            pl.BlockSpec((1, width_out), lambda i: (0, 0)),
        ],
        out_specs=pl.BlockSpec((block_rows, width_out), lambda i: (i, 0)),
        compiler_params=pltpu.CompilerParams(
            dimension_semantics=("parallel",),   # 2-TC sharding on v7x
            vmem_limit_bytes=vmem_limit,
        ),
    )(xp, w_bd, b_bd)


def simple_model_forward(x, params, block_rows=4096):
    """y = x @ W^T + b for x: [B, in_features]."""
    B, in_f = x.shape
    assert in_f == params["in_features"]
    pack = params["pack"]
    out_f = params["out_features"]

    # Tiny / pack-unaligned batches: direct unpadded call (launch-bound regime).
    if B % pack != 0 and B <= SMALL_DIRECT_MAX:
        return _linear_direct(x, params)

    # Packed path: `pack` logical rows per 128-lane row via a free reshape.
    pad_b = (-B) % pack
    rows = (B + pad_b) // pack
    pad_r = ((-rows) % block_rows) if rows > block_rows else 0
    total_pad = pad_b + pad_r * pack
    x_in = jnp.pad(x, ((0, total_pad), (0, 0))) if total_pad else x
    rows_total = (B + total_pad) // pack

    xp = x_in.reshape(rows_total, pack * in_f)      # free: row-major contiguous
    yp = _linear_packed(xp, params, block_rows)
    y = yp.reshape(rows_total * pack, out_f)        # free
    return y[:B] if total_pad else y


if __name__ == "__main__":
    key = jax.random.PRNGKey(0)
    k_w, k_b, k_x, k_x2, k_x3 = jax.random.split(key, 5)

    in_features, out_features = 8, 8

    # nn.Linear-style uniform(-1/sqrt(in), 1/sqrt(in)) init.
    bound = 1.0 / jnp.sqrt(jnp.float32(in_features))
    weight = jax.random.uniform(k_w, (out_features, in_features),
                                jnp.float32, -bound, bound)
    bias = jax.random.uniform(k_b, (out_features,), jnp.float32, -bound, bound)

    params = prepare_params(weight, bias)   # once per parameter update

    # 1) The module's demo shape: batch=2 (tiny / unaligned -> direct path).
    x = jax.random.normal(k_x, (2, in_features), jnp.float32)
    y = simple_model_forward(x, params)
    jax.block_until_ready(y)
    y_ref = x @ weight.T + bias
    assert y.shape == (2, out_features)
    assert jnp.allclose(y, y_ref, atol=2e-2, rtol=2e-2)

    # 2) Packed single-block path (B multiple of 16, fits one VMEM block).
    x_mid = jax.random.normal(k_x2, (1536, in_features), jnp.float32)
    y_mid = simple_model_forward(x_mid, params)
    jax.block_until_ready(y_mid)
    y_mid_ref = x_mid @ weight.T + bias
    assert y_mid.shape == (1536, out_features)
    assert jnp.allclose(y_mid, y_mid_ref, atol=2e-2, rtol=2e-2)

    # 3) Packed tiled path with bf16 HBM I/O (grid of 2 x 4096-packed-row tiles,
    #    f32 MXU accumulation + f32 bias epilogue inside the kernel).
    x_big = jax.random.normal(k_x3, (131072, in_features),
                              jnp.float32).astype(jnp.bfloat16)
    y_big = simple_model_forward(x_big, params)
    jax.block_until_ready(y_big)
    y_big_ref = x_big.astype(jnp.float32) @ weight.T + bias
    assert y_big.shape == (131072, out_features)
    assert jnp.allclose(y_big.astype(jnp.float32), y_big_ref, atol=6e-2, rtol=3e-2)

    print("KERNEL_OK")
</pallas_src>

<mosaic_0001>
module attributes {stable_mosaic.version = 11 : i64} {
  func.func @_linear_kernel(%arg0: memref<2x8xf32, #tpu.memory_space<vmem>>, %arg1: memref<8x8xf32, #tpu.memory_space<vmem>>, %arg2: memref<1x8xf32, #tpu.memory_space<vmem>>, %arg3: memref<2x8xf32, #tpu.memory_space<vmem>>) attributes {dimension_semantics = [], scalar_prefetch = 0 : i64, scratch_operands = 0 : i64, tpu.core_type = #tpu.core_type<tc>} {
    %c0 = arith.constant 0 : index
    %c0_0 = arith.constant 0 : index
    %0 = vector.load %arg0[%c0, %c0_0] : memref<2x8xf32, #tpu.memory_space<vmem>>, vector<2x8xf32>
    %c0_1 = arith.constant 0 : index
    %c0_2 = arith.constant 0 : index
    %1 = vector.load %arg1[%c0_1, %c0_2] : memref<8x8xf32, #tpu.memory_space<vmem>>, vector<8x8xf32>
    %cst = arith.constant dense<0.000000e+00> : vector<2x8xf32>
    %2 = tpu.matmul %0, %1, %cst {dimension_numbers = #tpu.dot_dimension_numbers<[1], [0], [0], [1], [0, 0, 1, 1], [], []>} : vector<2x8xf32>, vector<8x8xf32>, vector<2x8xf32> -> vector<2x8xf32>
    %c0_3 = arith.constant 0 : index
    %c0_4 = arith.constant 0 : index
    %3 = vector.load %arg2[%c0_3, %c0_4] : memref<1x8xf32, #tpu.memory_space<vmem>>, vector<1x8xf32>
    %4 = vector.broadcast %3 : vector<1x8xf32> to vector<2x8xf32>
    %5 = arith.addf %2, %4 : vector<2x8xf32>
    %c0_5 = arith.constant 0 : index
    %c0_6 = arith.constant 0 : index
    %6 = vector.load %arg3[%c0_5, %c0_6] : memref<2x8xf32, #tpu.memory_space<vmem>>, vector<2x8xf32>
    tpu.vector_store %arg3[%c0_5, %c0_6], %5 {strides = array<i32>} : memref<2x8xf32, #tpu.memory_space<vmem>>, vector<2x8xf32>,
    return
  }
}

</mosaic_0001>

<llo_original>
// kernel: tpu_custom_call.1
$region0: #{tpu_custom_call.1}
  #allocation0 [shape = 'u32[]', space=smem, size = 0x4, offset = 0x4, fixed_abs, tag = 'smem constant byte address 0x4 - core index']
  #allocation1 [shape = 'u32[72,128]{1,0:T(1,128)}', space=vmem, size = 0x9000, scoped, tag = 'internal scratch']
  %s0 = inlined_call_operand.hbm [shape: f32[2,8], index: 0, kind: input, shape index: {}]
  %s1 = inlined_call_operand.hbm [shape: f32[8,8], index: 1, kind: input, shape index: {}]
  %s2 = inlined_call_operand.vmem [shape: f32[1,8], index: 2, kind: input, shape index: {}]
  %s3 = inlined_call_operand.hbm [shape: f32[2,8], index: 3, kind: output, shape index: {}]
  %s4 = sld [smem:[#allocation0]]
  $region30: #{tpu_custom_call.1} parent=0
    _
  %s6 = ssub.s32 1, %s4
  %s7 = scalar_select 0, %s6, %s4
  $region1: #{tpu_custom_call.1} parent=0
    #allocation2 [shape = 'u8[1024]{0}', space=vmem, size = 0x400, scoped, tag = 'input window, operand 0, single buffered']
    #allocation3 [shape = 's32[1]{0}', space=sflag, size = 0x4, scoped, tag = 'scoped memory for tpu_custom_call.1']
    #allocation4 [shape = 's32[1]{0}', space=sflag, size = 0x4, scoped, tag = 'scoped memory for tpu_custom_call.1']
    #allocation5 [shape = 'u8[4096]{0}', space=vmem, size = 0x1000, scoped, tag = 'input window, operand 1, single buffered']
    #allocation6 [shape = 's32[1]{0}', space=sflag, size = 0x4, scoped, tag = 'scoped memory for tpu_custom_call.1']
    #allocation7 [shape = 'u8[1024]{0}', space=vmem, size = 0x400, scoped, tag = 'output window, operand 0, single buffered']
    %8 = vsyncpa [#allocation3], 0
    %9 = vsyncpa [#allocation6], 0
    %10 = vsyncpa [#allocation4], 0
    // Predicated region
    $region2: #{tpu_custom_call.1} parent=1 // pred_check
      _
    $region3: #{tpu_custom_call.1} parent=1 // pred_check_branch
      %12 = sbr.rel (0) target = $region5
    $region4: #{tpu_custom_call.1} parent=1 // pred_region
      %14 = vsyncadd [#allocation3], 0
      %s16 = sshll.u32 %s0, 4
      %s17 = int_to_ptr.hbm [resolvable:$true] %s16
      %s18 = sshll.u32 [#allocation2], 4
      %s19 = int_to_ptr.vmem [resolvable:$true] %s18
      %21 = dma.hbm_to_vmem [thread:$0]  %s17, 32, %s19, [#allocation3]
    $region5: #{tpu_custom_call.1} parent=1 // pred_fallthru
      _
    // Predicated region
    $region6: #{tpu_custom_call.1} parent=1 // pred_check
      _
    $region7: #{tpu_custom_call.1} parent=1 // pred_check_branch
      %23 = sbr.rel (0) target = $region9
    $region8: #{tpu_custom_call.1} parent=1 // pred_region
      %25 = vsyncadd [#allocation6], 0
      %s27 = sshll.u32 %s1, 4
      %s28 = int_to_ptr.hbm [resolvable:$true] %s27
      %s29 = sshll.u32 [#allocation5], 4
      %s30 = int_to_ptr.vmem [resolvable:$true] %s29
      %32 = dma.hbm_to_vmem [thread:$0]  %s28, 128, %s30, [#allocation6]
    $region9: #{tpu_custom_call.1} parent=1 // pred_fallthru
      _
    // Predicated region
    $region10: #{tpu_custom_call.1} parent=1 // pred_check
      _
    $region11: #{tpu_custom_call.1} parent=1 // pred_check_branch
      %34 = sbr.rel (0) target = $region13
    $region12: #{tpu_custom_call.1} parent=1 // pred_region
      _
    $region13: #{tpu_custom_call.1} parent=1 // pred_fallthru
      _
    // Predicated region
    $region14: #{tpu_custom_call.1} parent=1 // pred_check
      _
    $region15: #{tpu_custom_call.1} parent=1 // pred_check_branch
      %36 = sbr.rel (0) target = $region17
    $region16: #{tpu_custom_call.1} parent=1 // pred_region
      %38 = dma.done [#allocation3], 32
    $region17: #{tpu_custom_call.1} parent=1 // pred_fallthru
      _
    // Predicated region
    $region18: #{tpu_custom_call.1} parent=1 // pred_check
      _
    $region19: #{tpu_custom_call.1} parent=1 // pred_check_branch
      %40 = sbr.rel (0) target = $region21
    $region20: #{tpu_custom_call.1} parent=1 // pred_region
      %42 = dma.done [#allocation6], 128
    $region21: #{tpu_custom_call.1} parent=1 // pred_fallthru
      _
    %v43 = vld [vmem:[#allocation2] sm:$0x3]
    %v44 = vld [vmem:[#allocation5] sm:$0xff]
    %v45 = vld [vmem:[%s2] sm:$0x1]
    %v47 = vperm.slane %v45, 0
    %vm49 = vcmask 64512
    %v51 = vsel %vm49, %v43, 0
    %53 = vmatpush.msra.mxu0 0.0
    %54 = vmatpush.msra.mxu0 0.0
    %55 = vmatpush.msra.mxu0 0.0
    %56 = vmatpush.msra.mxu0 0.0
    %57 = vmatpush.msra.mxu0 0.0
    %58 = vmatpush.msra.mxu0 0.0
    %59 = vmatpush.msra.mxu0 0.0
    %60 = vmatpush.msra.mxu0 0.0
    %61 = vmatpush.msra.mxu0 0.0
    %62 = vmatpush.msra.mxu0 0.0
    %63 = vmatpush.msra.mxu0 0.0
    %64 = vmatpush.msra.mxu0 0.0
    %65 = vmatpush.msra.mxu0 0.0
    %66 = vmatpush.msra.mxu0 0.0
    %67 = vmatpush.msra.mxu0 0.0
    %68 = vmatpush.msra.mxu0 %v44
    %69 = vmatmul.f32.gmra.mxu0 %v51
    %v70 = vpop.f32.mrf.mxu0
    %v71 = vadd.f32 %v47, %v70
    %72 = vdwg.mxu0
    %vm73 = vcmask 58368
    %74 = vst.msk [vmem:[#allocation7] sm:$0x3] %vm73, %v71
    // Predicated region
    $region22: #{tpu_custom_call.1} parent=1 // pred_check
      _
    $region23: #{tpu_custom_call.1} parent=1 // pred_check_branch
      %76 = sbr.rel (0) target = $region25
    $region24: #{tpu_custom_call.1} parent=1 // pred_region
      %78 = vsyncadd [#allocation4], 0
      %s80 = sshll.u32 [#allocation7], 4
      %s81 = int_to_ptr.vmem [resolvable:$true] %s80
      %s82 = sshll.u32 %s3, 4
      %s83 = int_to_ptr.hbm [resolvable:$true] %s82
      %85 = dma.vmem_to_hbm [thread:$0]  %s81, 32, %s83, [#allocation4]
    $region25: #{tpu_custom_call.1} parent=1 // pred_fallthru
      _
    // Predicated region
    $region26: #{tpu_custom_call.1} parent=1 // pred_check
      _
    $region27: #{tpu_custom_call.1} parent=1 // pred_check_branch
      %87 = sbr.rel (0) target = $region29
    $region28: #{tpu_custom_call.1} parent=1 // pred_region
      %89 = dma.done [#allocation4], 32
    $region29: #{tpu_custom_call.1} parent=1 // pred_fallthru
      _
    %90 = vsyncpa [#allocation3], 1
    %91 = vsyncpa [#allocation6], 1
    %92 = vsyncpa [#allocation4], 1

</llo_original>
